<compile_context>
chip_gen: v6e
topology: v6e:2x2x1
jax: 0.10.0
libtpu: 0.0.40
codegen_flags: <defaults>
</compile_context>

<pallas_src>
import functools

import jax
import jax.numpy as jnp
import numpy as np
from jax.experimental import pallas as pl
from jax.experimental.pallas import tpu as pltpu


def _triplet_kernel(count_ref, proto_ref, pn_ref, out_ref, acc_ref, *, margin, tile_c):
    i = pl.program_id(0)

    @pl.when(i == 0)
    def _init():
        acc_ref[0] = jnp.float32(0.0)

    count = count_ref[0]                                   # scalar int32 (SMEM)
    proto = proto_ref[...].astype(jnp.float32)             # (1, D)
    pos = pn_ref[0].astype(jnp.float32)                    # (TC, D)
    neg = pn_ref[1].astype(jnp.float32)                    # (TC, D)

    # Fused: ||p-pos||^2 - ||p-neg||^2 == sum_d (neg-pos) * (2*proto - pos - neg)
    dp_minus_dn = jnp.sum((neg - pos) * (2.0 * proto - pos - neg),
                          axis=1, keepdims=True)           # (TC, 1)
    losses = jnp.maximum(dp_minus_dn + jnp.float32(margin), 0.0)

    row = jax.lax.broadcasted_iota(jnp.int32, losses.shape, 0) + i * tile_c
    masked = jnp.where(row < count, losses, jnp.float32(0.0))
    acc_ref[0] += jnp.sum(masked)

    @pl.when(i == pl.num_programs(0) - 1)
    def _finalize():
        out_ref[0, 0] = acc_ref[0] / count.astype(jnp.float32)


@functools.partial(jax.jit, static_argnames=("tc", "margin"))
def _triplet_call(proto, embedding, pn_idx, count_arr, *, tc, margin):
    d = proto.shape[0]
    c_bucket = pn_idx.shape[1]

    # Single gather builds the stacked (2, C, D) operand: no zero-pad/scatter copies.
    pn = jnp.take(embedding, pn_idx, axis=0)               # (2, c_bucket, D)
    proto2 = proto[None, :]                                # (1, D)

    kernel = functools.partial(_triplet_kernel, margin=margin, tile_c=tc)
    out = pl.pallas_call(
        kernel,
        out_shape=jax.ShapeDtypeStruct((1, 1), jnp.float32),
        grid_spec=pltpu.PrefetchScalarGridSpec(
            num_scalar_prefetch=1,                         # count -> SMEM
            grid=(c_bucket // tc,),
            in_specs=[
                # proto stays resident (constant block index across the grid)
                pl.BlockSpec((1, d), lambda i, c: (0, 0)),
                # stacked pos/neg streamed tile-by-tile (double-buffered DMA)
                pl.BlockSpec((2, tc, d), lambda i, c: (0, i, 0)),
            ],
            out_specs=pl.BlockSpec((1, 1), lambda i, c: (0, 0),
                                   memory_space=pltpu.MemorySpace.SMEM),
            scratch_shapes=[pltpu.SMEM((1,), jnp.float32)],  # running sum
        ),
        compiler_params=pltpu.CompilerParams(
            dimension_semantics=("arbitrary",),             # reduction axis
            vmem_limit_bytes=48 * 1024 * 1024,
        ),
    )(count_arr, proto2, pn)
    return out[0, 0]


def triplet_loss(proto, embedding, true_label, margin=1.0, tc_max=512):
    """proto: (D,) f32, embedding: (N, D) f32, true_label: (N,) ints (host-concrete)."""
    proto = jnp.asarray(proto, jnp.float32)
    embedding = jnp.asarray(embedding, jnp.float32)
    labels = np.asarray(true_label)

    # Data-dependent boolean selection must be concrete (host glue); the hot path
    # (distances, relu, reduction, normalization) runs in the Pallas kernel.
    pos_idx = np.nonzero(labels == 0)[0]
    neg_idx = np.nonzero(labels != 0)[0]
    count = int(min(pos_idx.size, neg_idx.size))
    assert count > 0, "need at least one positive and one negative sample"

    d = int(proto.shape[0])

    # Bucket the candidate count to a power of two (>=8) -> stable kernel shapes,
    # no recompile per distinct count; padded rows are masked in-kernel.
    c_bucket = max(8, int(pl.next_power_of_2(count)))

    # Tile size: power of two, capped so (pos+neg) x double-buffer stays <= ~24 MiB
    # (fits v7x's 64 MiB VMEM and the raised scoped limit on all generations).
    bytes_per_row = 2 * 2 * d * 4
    tc = max(8, min(int(tc_max), (24 * 1024 * 1024) // max(bytes_per_row, 1)))
    tc = 1 << (tc.bit_length() - 1)          # round down to a power of two
    tc = min(tc, c_bucket)

    def pad_idx(idx):
        buf = np.zeros((c_bucket,), np.int32)
        buf[:count] = idx[:count]
        return buf

    pn_idx = jnp.asarray(np.stack([pad_idx(pos_idx), pad_idx(neg_idx)], axis=0))
    count_arr = jnp.array([count], jnp.int32)

    return _triplet_call(proto, embedding, pn_idx, count_arr,
                         tc=int(tc), margin=float(margin))


def _reference(proto, embedding, labels, margin=1.0):
    proto = np.asarray(proto, np.float32)
    embedding = np.asarray(embedding, np.float32)
    labels = np.asarray(labels)
    pos = embedding[labels == 0]
    neg = embedding[labels != 0]
    count = min(pos.shape[0], neg.shape[0])
    total = 0.0
    for cc in range(count):
        dp = float(np.sum((proto - pos[cc]) ** 2))
        dn = float(np.sum((proto - neg[cc]) ** 2))
        total += max(dp - dn + margin, 0.0)
    return total / count


if __name__ == "__main__":
    key = jax.random.PRNGKey(0)
    k_proto, k_emb, k_emb2, k_lab2 = jax.random.split(key, 4)

    # Test 1: small shapes matching the module's forward (D=32, N=8).
    D, N = 32, 8
    proto = jax.random.normal(k_proto, (D,), dtype=jnp.float32)
    embedding = jax.random.normal(k_emb, (N, D), dtype=jnp.float32)
    true_label = np.array([0, 1, 0, 2, 0, 1, 1, 0], dtype=np.int32)

    out = jax.block_until_ready(triplet_loss(proto, embedding, true_label, margin=1.0))
    ref = _reference(np.array(proto), np.array(embedding), true_label, margin=1.0)
    np.testing.assert_allclose(float(out), ref, rtol=1e-5, atol=1e-5)

    # Test 2: larger N with a small tile cap to exercise the multi-step grid
    # (streaming + accumulator init/finalize path).
    N2 = 64
    embedding2 = jax.random.normal(k_emb2, (N2, D), dtype=jnp.float32)
    labels2 = np.array(jax.random.randint(k_lab2, (N2,), 0, 3), dtype=np.int32)
    labels2[0] = 0
    labels2[1] = 1
    out2 = jax.block_until_ready(
        triplet_loss(proto, embedding2, labels2, margin=1.0, tc_max=8))
    ref2 = _reference(np.array(proto), np.array(embedding2), labels2, margin=1.0)
    np.testing.assert_allclose(float(out2), ref2, rtol=1e-5, atol=1e-5)

    print("KERNEL_OK")
</pallas_src>

<mosaic_0001>
module attributes {stable_mosaic.version = 11 : i64} {
  func.func @_triplet_kernel(%arg0: i32, %arg1: memref<1xi32, #tpu.memory_space<smem>>, %arg2: memref<1x32xf32, #tpu.memory_space<vmem>>, %arg3: memref<2x8x32xf32, #tpu.memory_space<vmem>>, %arg4: memref<1x1xf32, #tpu.memory_space<smem>>, %arg5: memref<1xf32, #tpu.memory_space<smem>>) attributes {dimension_semantics = [#tpu.dimension_semantics<arbitrary>], iteration_bounds = array<i64: 1>, scalar_prefetch = 1 : i64, scratch_operands = 1 : i64, tpu.core_type = #tpu.core_type<tc>, window_params = [{pipeline_mode = #tpu.pipeline_mode<synchronous>, transform_indices = @transform_0, window_bounds = array<i64: 1, 32>}, {transform_indices = @transform_1, window_bounds = array<i64: 2, 8, 32>}, {transform_indices = @transform_2, window_bounds = array<i64: 1, 1>}]} {
    %c0_i32 = arith.constant 0 : i32
    %0 = arith.cmpi eq, %arg0, %c0_i32 : i32
    %1 = arith.extui %0 : i1 to i32
    %c0_i32_0 = arith.constant 0 : i32
    %2 = arith.cmpi ne, %1, %c0_i32_0 : i32
    scf.if %2 {
      %cst_17 = arith.constant 0.000000e+00 : f32
      %c0_18 = arith.constant 0 : index
      %40 = memref.load %arg5[%c0_18] : memref<1xf32, #tpu.memory_space<smem>>
      memref.store %cst_17, %arg5[%c0_18] : memref<1xf32, #tpu.memory_space<smem>>
    } else {
    }
    %c0 = arith.constant 0 : index
    %3 = memref.load %arg1[%c0] : memref<1xi32, #tpu.memory_space<smem>>
    %c0_1 = arith.constant 0 : index
    %c0_2 = arith.constant 0 : index
    %4 = vector.load %arg2[%c0_1, %c0_2] : memref<1x32xf32, #tpu.memory_space<vmem>>, vector<1x32xf32>
    %c0_3 = arith.constant 0 : index
    %c0_4 = arith.constant 0 : index
    %c0_5 = arith.constant 0 : index
    %5 = vector.load %arg3[%c0_3, %c0_4, %c0_5] : memref<2x8x32xf32, #tpu.memory_space<vmem>>, vector<1x8x32xf32>
    %6 = vector.shape_cast %5 : vector<1x8x32xf32> to vector<8x32xf32>
    %c1 = arith.constant 1 : index
    %c0_6 = arith.constant 0 : index
    %c0_7 = arith.constant 0 : index
    %7 = vector.load %arg3[%c1, %c0_6, %c0_7] : memref<2x8x32xf32, #tpu.memory_space<vmem>>, vector<1x8x32xf32>
    %8 = vector.shape_cast %7 : vector<1x8x32xf32> to vector<8x32xf32>
    %9 = arith.subf %8, %6 : vector<8x32xf32>
    %cst = arith.constant 2.000000e+00 : f32
    %10 = vector.broadcast %cst : f32 to vector<1x32xf32>
    %11 = arith.mulf %10, %4 : vector<1x32xf32>
    %12 = vector.broadcast %11 : vector<1x32xf32> to vector<8x32xf32>
    %13 = arith.subf %12, %6 : vector<8x32xf32>
    %14 = arith.subf %13, %8 : vector<8x32xf32>
    %15 = arith.mulf %9, %14 : vector<8x32xf32>
    %cst_8 = arith.constant dense<0.000000e+00> : vector<8xf32>
    %16 = vector.multi_reduction <add>, %15, %cst_8 [1] : vector<8x32xf32> to vector<8xf32>
    %17 = vector.shape_cast %16 : vector<8xf32> to vector<8x1xf32>
    %cst_9 = arith.constant 1.000000e+00 : f32
    %18 = vector.broadcast %cst_9 : f32 to vector<8x1xf32>
    %19 = arith.addf %17, %18 : vector<8x1xf32>
    %cst_10 = arith.constant 0.000000e+00 : f32
    %20 = vector.broadcast %cst_10 : f32 to vector<8x1xf32>
    %21 = arith.maximumf %19, %20 : vector<8x1xf32>
    %22 = tpu.iota {dimensions = array<i32: 0>} : vector<8x1xi32>
    %c8_i32 = arith.constant 8 : i32
    %23 = arith.muli %arg0, %c8_i32 : i32
    %24 = vector.broadcast %23 : i32 to vector<8x1xi32>
    %25 = arith.addi %22, %24 : vector<8x1xi32>
    %26 = vector.broadcast %3 : i32 to vector<8x1xi32>
    %27 = arith.cmpi slt, %25, %26 : vector<8x1xi32>
    %cst_11 = arith.constant 0.000000e+00 : f32
    %28 = vector.broadcast %cst_11 : f32 to vector<8x1xf32>
    %29 = arith.select %27, %21, %28 : vector<8x1xi1>, vector<8x1xf32>
    %c0_12 = arith.constant 0 : index
    %30 = memref.load %arg5[%c0_12] : memref<1xf32, #tpu.memory_space<smem>>
    %31 = vector.shape_cast %29 : vector<8x1xf32> to vector<1x8x1xf32>
    %cst_13 = arith.constant dense<0.000000e+00> : vector<1xf32>
    %32 = vector.multi_reduction <add>, %31, %cst_13 [1, 2] : vector<1x8x1xf32> to vector<1xf32>
    %33 = vector.shape_cast %32 : vector<1xf32> to vector<1x1x1xf32>
    %34 = vector.extract %33[0, 0, 0] : f32 from vector<1x1x1xf32>
    %35 = arith.addf %30, %34 : f32
    %c0_14 = arith.constant 0 : index
    %36 = memref.load %arg5[%c0_14] : memref<1xf32, #tpu.memory_space<smem>>
    memref.store %35, %arg5[%c0_14] : memref<1xf32, #tpu.memory_space<smem>>
    %c0_i32_15 = arith.constant 0 : i32
    %37 = arith.cmpi eq, %arg0, %c0_i32_15 : i32
    %38 = arith.extui %37 : i1 to i32
    %c0_i32_16 = arith.constant 0 : i32
    %39 = arith.cmpi ne, %38, %c0_i32_16 : i32
    scf.if %39 {
      %c0_17 = arith.constant 0 : index
      %40 = memref.load %arg5[%c0_17] : memref<1xf32, #tpu.memory_space<smem>>
      %41 = arith.sitofp %3 : i32 to f32
      %42 = arith.divf %40, %41 : f32
      %c0_18 = arith.constant 0 : index
      %c0_19 = arith.constant 0 : index
      %43 = memref.load %arg4[%c0_18, %c0_19] : memref<1x1xf32, #tpu.memory_space<smem>>
      memref.store %42, %arg4[%c0_18, %c0_19] : memref<1x1xf32, #tpu.memory_space<smem>>
    } else {
    }
    return
  }
  func.func @transform_0(%arg0: i32, %arg1: memref<1xi32, #tpu.memory_space<smem>>) -> (i32, i32) {
    %c0_i32 = arith.constant 0 : i32
    %c0_i32_0 = arith.constant 0 : i32
    %c0_i32_1 = arith.constant 0 : i32
    return %c0_i32, %c0_i32_0 : i32, i32
  }
  func.func @transform_1(%arg0: i32, %arg1: memref<1xi32, #tpu.memory_space<smem>>) -> (i32, i32, i32) {
    %c0_i32 = arith.constant 0 : i32
    %c0_i32_0 = arith.constant 0 : i32
    %c0_i32_1 = arith.constant 0 : i32
    return %c0_i32, %arg0, %c0_i32_0 : i32, i32, i32
  }
  func.func @transform_2(%arg0: i32, %arg1: memref<1xi32, #tpu.memory_space<smem>>) -> (i32, i32) {
    %c0_i32 = arith.constant 0 : i32
    %c0_i32_0 = arith.constant 0 : i32
    %c0_i32_1 = arith.constant 0 : i32
    return %c0_i32, %c0_i32_0 : i32, i32
  }
}

</mosaic_0001>

<llo_original>
// kernel: _triplet_call.1
$region0: #{_triplet_call.1}
  #allocation0 [shape = 'u32[]', space=smem, size = 0x4, offset = 0x4, fixed_abs, tag = 'smem constant byte address 0x4 - core index']
  #allocation1 [shape = 'u32[144,128]{1,0:T(1,128)}', space=vmem, size = 0x12000, scoped, tag = 'internal scratch']
  #allocation2 [shape = 'f32[1]{0:T(128)}', space=smem, size = 0x200, scoped, tag = 'scratch operand']
  #allocation3 [shape = 's32[1]{0}', space=sflag, size = 0x4, scoped, tag = 'scoped memory for _triplet_call.1']
  #allocation4 [shape = 's32[1]{0:T(128)S(6)}', space=smem, size = 0x200, scoped, tag = 'prefetched SMEM operand 0']
  %s0 = inlined_call_operand.<no memory space> [shape: s32[1], index: 0, kind: input, shape index: {}]
  %s1 = inlined_call_operand.vmem [shape: f32[1,32], index: 1, kind: input, shape index: {}]
  %s2 = inlined_call_operand.vmem [shape: f32[2,8,32], index: 2, kind: input, shape index: {}]
  %s3 = inlined_call_operand.hbm [shape: f32[1,1], index: 3, kind: output, shape index: {}]
  %s4 = sld [smem:[#allocation0]]
  $region26: #{_triplet_call.1} parent=0
    _
  %s6 = ssub.s32 1, %s4
  %s7 = scalar_select 0, %s6, %s4
  %8 = sst [smem:[#allocation4]] %s0
  $region1: #{_triplet_call.1} parent=0
    #allocation5 [shape = 'u8[512]{0}', space=smem, size = 0x200, scoped, tag = 'output window, operand 0, single buffered']
    #allocation6 [shape = 's32[1]{0}', space=sflag, size = 0x4, scoped, tag = 'scoped memory for _triplet_call.1']
    %9 = vsyncpa [#allocation6], 0
    // Predicated region
    $region2: #{_triplet_call.1} parent=1 // pred_check
      _
    $region3: #{_triplet_call.1} parent=1 // pred_check_branch
      %11 = sbr.rel (0) target = $region5
    $region4: #{_triplet_call.1} parent=1 // pred_region
      _
    $region5: #{_triplet_call.1} parent=1 // pred_fallthru
      _
    // Predicated region
    $region6: #{_triplet_call.1} parent=1 // pred_check
      _
    $region7: #{_triplet_call.1} parent=1 // pred_check_branch
      %13 = sbr.rel (0) target = $region9
    $region8: #{_triplet_call.1} parent=1 // pred_region
      _
    $region9: #{_triplet_call.1} parent=1 // pred_fallthru
      _
    %p14 = scmp.eq.s32.totalorder 0, 0
    // Predicated region
    $region10: #{_triplet_call.1} parent=1 // pred_check
      %p15 = pneg %p14
    $region11: #{_triplet_call.1} parent=1 // pred_check_branch
      %17 = sbr.rel (%p15) target = $region13
    $region12: #{_triplet_call.1} parent=1 // pred_region
      %s18 = scalar_lea.smem [#allocation2], 0
      %19 = sst [smem:[%s18]] 0.0
    $region13: #{_triplet_call.1} parent=1 // pred_fallthru
      _
    %s20 = sld [smem:[#allocation4]]
    %v21 = vld [vmem:[%s1] sm:$0x1]
    %v22 = vld [vmem:[%s2] sm:$0xff]
    %s23 = scalar_lea.vmem %s2, 8
    %v24 = vld [vmem:[%s23] sm:$0xff]
    %v25 = vsub.f32 %v24, %v22
    %v26 = vmul.f32 %v21, 2.0
    %v28 = vlaneseq
    %v29 = vshrl.u32 %v28, 7
    %v30 = vsub.s32 0, %v29
    %v31 = vrot.slane %v26, %v30
    %v33 = vsub.f32 %v31, %v22
    %v34 = vsub.f32 %v33, %v24
    %v35 = vmul.f32 %v25, %v34
    %vm36 = vcmask 261120
    %v37 = vsel %vm36, %v35, 0.0
    %38 = vadd.xlane.f32.xlu0 %v37
    %v39 = vpop.xlane.xlu0 %38
    %v40 = vadd.f32 %v39, 1.0
    %v41 = vmax.f32 %v40, 0.0
    %v42 = vlaneseq
    %v43 = vshrl.u32 %v42, 7
    %s44 = smul.u32 0, 8
    %v45 = vstv %s44
    %v46 = vadd.s32 %v43, %v45
    %v47 = vstv %s20
    %vm48 = vcmp.lt.s32.totalorder %v46, %v47
    %v49 = vsel %vm48, %v41, 0.0
    %s50 = sld [smem:[#allocation2]]
    %vm51 = vcmask 7168
    %v52 = vsel %vm51, %v49, 0.0
    %53 = vadd.xlane.f32.xlu0 %v52
    %v54 = vpop.xlane.xlu0 %53
    %v55 = vrot.slane %v54, 4
    %v56 = vadd.f32 %v54, %v55
    %v57 = vrot.slane %v56, 2
    %v58 = vadd.f32 %v56, %v57
    %v59 = vrot.slane %v58, 1
    %v60 = vadd.f32 %v58, %v59
    %s61 = vtos %v60
    %s62 = sadd.f32 %s50, %s61
    %s63 = scalar_lea.smem [#allocation2], 0
    %64 = sst [smem:[%s63]] %s62
    // Predicated region
    $region14: #{_triplet_call.1} parent=1 // pred_check
      %p65 = pneg %p14
    $region15: #{_triplet_call.1} parent=1 // pred_check_branch
      %67 = sbr.rel (%p65) target = $region17
    $region16: #{_triplet_call.1} parent=1 // pred_region
      %s68 = sld [smem:[#allocation2]]
      %s69 = scvt.s32.f32 %s20
      %v70 = vstv %s69
      %v71 = vrcp.pop %v70
      %s72 = vtos %v71
      %s73 = smul.f32 %s68, %s72
      %s74 = scalar_lea.smem [#allocation5], 0
      %75 = sst [smem:[%s74]] %s73
    $region17: #{_triplet_call.1} parent=1 // pred_fallthru
      _
    // Predicated region
    $region18: #{_triplet_call.1} parent=1 // pred_check
      _
    $region19: #{_triplet_call.1} parent=1 // pred_check_branch
      %77 = sbr.rel (0) target = $region21
    $region20: #{_triplet_call.1} parent=1 // pred_region
      %s79 = ssub.s32 16, 16
      %80 = vsyncadd [#allocation6], %s79
      %83 = dma.smem_to_hbm [#allocation5], 16, %s3, [#allocation6]
    $region21: #{_triplet_call.1} parent=1 // pred_fallthru
      _
    // Predicated region
    $region22: #{_triplet_call.1} parent=1 // pred_check
      _
    $region23: #{_triplet_call.1} parent=1 // pred_check_branch
      %85 = sbr.rel (0) target = $region25
    $region24: #{_triplet_call.1} parent=1 // pred_region
      %86 = dma.done [#allocation6], 16
    $region25: #{_triplet_call.1} parent=1 // pred_fallthru
      _
    %87 = sfence
    %88 = vsyncpa [#allocation6], 1

</llo_original>
